<compile_context>
chip_gen: v7x
topology: tpu7x:2x2x1
jax: 0.10.0
libtpu: 0.0.40
codegen_flags: <defaults>
</compile_context>

<pallas_src>
import functools

import jax
import jax.numpy as jnp
from jax.experimental import pallas as pl
from jax.experimental.pallas import tpu as pltpu


def _round_up(x: int, m: int) -> int:
    return ((x + m - 1) // m) * m


def _sinusoidal_kernel(t_ref, m_ref, out_ref, *, r: int):
    # t_ref:   (TN, r)        f32 — r consecutive time steps folded per output row
    # m_ref:   (r, r*dim)     f32 — block-diagonal interleaved inverse-frequency selector
    # out_ref: (TN, r*dim)    f32 — lane-dense output block
    t_blk = t_ref[...]
    m_blk = m_ref[...]
    # out[i, j*dim + k] = t[i, j] * inv_freq_rep[k]  via r rank-1 broadcast multiplies.
    acc = t_blk[:, 0:1] * m_blk[0:1, :]
    for j in range(1, r):  # r is a small static constant; unrolled at trace time
        acc = acc + t_blk[:, j:j + 1] * m_blk[j:j + 1, :]
    out_ref[...] = acc


def sinusoidal_embeddings(t: jax.Array, dim: int, *, block_rows: int | None = None,
                          min_pallas_elements: int = 65536) -> jax.Array:
    """Pallas implementation of SinusoidalEmbeddings.forward(t)."""
    assert dim % 2 == 0, "dim must be even"

    # ---- parameter setup (matches nn.Module __init__, deterministic) ----
    inv_freq = 1.0 / (10000.0 ** (jnp.arange(0, dim, 2, dtype=jnp.float32) / dim))
    inv_freq_rep = jnp.repeat(inv_freq, 2)              # (dim,)  [f0, f0, f1, f1, ...]

    lead_shape = t.shape
    n = 1
    for s in lead_shape:
        n *= s
    t_flat = t.reshape(n).astype(jnp.float32)           # like torch .float()

    # ---- small / empty input fallback: launch + per-step overhead would dominate ----
    if n == 0 or n * dim < min_pallas_elements:
        freqs = t_flat[:, None] * inv_freq_rep[None, :]
        return freqs.reshape(*lead_shape, dim)

    # ---- lane-density folding: pack r rows into one (r*dim)-lane output row ----
    if dim < 128 and 128 % dim == 0:
        r = min(128 // dim, 8)                           # e.g. dim=32 -> r=4, dim=64 -> r=2
    else:
        r = 1                                            # dim already a multiple of 128 (or odd case)
    dim_out = r * dim

    # ---- row-tile size: ~4 MiB per output buffer (double-buffered) fits every generation ----
    if block_rows is None:
        target_bytes = 4 * 1024 * 1024
        tn = target_bytes // (dim_out * 4)
        tn = max(8, min(2048, (tn // 8) * 8))
    else:
        tn = max(8, _round_up(block_rows, 8))

    n_folded = -(-n // r)
    tn = min(tn, _round_up(n_folded, 8))                 # don't over-pad tiny inputs
    n_folded_pad = _round_up(n_folded, tn)
    n_pad = n_folded_pad * r

    if n_pad > n:
        t_flat = jnp.pad(t_flat, (0, n_pad - n))
    t_folded = t_flat.reshape(n_folded_pad, r)

    # Block-diagonal selector: m[j, j*dim + k] = inv_freq_rep[k], zeros elsewhere.
    m = jnp.kron(jnp.eye(r, dtype=jnp.float32), inv_freq_rep.reshape(1, dim))  # (r, r*dim)

    grid = (n_folded_pad // tn,)
    out = pl.pallas_call(
        functools.partial(_sinusoidal_kernel, r=r),
        out_shape=jax.ShapeDtypeStruct((n_folded_pad, dim_out), jnp.float32),
        grid=grid,
        in_specs=[
            pl.BlockSpec((tn, r), lambda i: (i, 0)),        # t tile (last dim = full extent)
            pl.BlockSpec((r, dim_out), lambda i: (0, 0)),   # selector stays resident
        ],
        out_specs=pl.BlockSpec((tn, dim_out), lambda i: (i, 0)),
        compiler_params=pltpu.CompilerParams(
            dimension_semantics=("parallel",),              # shard rows across TCs (v7x megacore)
        ),
    )(t_folded, m)

    out = out.reshape(n_pad, dim)[:n]
    return out.reshape(*lead_shape, dim)


def _reference(t: jax.Array, dim: int) -> jax.Array:
    inv_freq = 1.0 / (10000.0 ** (jnp.arange(0, dim, 2, dtype=jnp.float32) / dim))
    freqs = t[..., None].astype(jnp.float32) * inv_freq[None, :]
    return jnp.repeat(freqs, 2, axis=-1)


if __name__ == "__main__":
    key = jax.random.PRNGKey(0)
    k1, k2 = jax.random.split(key)

    # Small shape consistent with module usage (batch=2, seq=8, dim=32).
    # Force the Pallas path (min_pallas_elements=0) so the kernel is exercised.
    batch, seq, dim = 2, 8, 32
    t = jax.random.uniform(k1, (batch, seq), dtype=jnp.float32) * 100.0
    out = jax.block_until_ready(sinusoidal_embeddings(t, dim, min_pallas_elements=0))
    ref = _reference(t, dim)
    assert out.shape == (batch, seq, dim), out.shape
    assert out.dtype == jnp.float32, out.dtype
    assert jnp.allclose(out, ref, rtol=1e-6, atol=1e-6), "mismatch vs reference (dim=32)"

    # Second config: dim=64 (r=2 folding) with multiple grid steps (block_rows=256).
    t2 = jax.random.uniform(k2, (2, 2048), dtype=jnp.float32) * 100.0
    out2 = jax.block_until_ready(
        sinusoidal_embeddings(t2, 64, block_rows=256, min_pallas_elements=0))
    ref2 = _reference(t2, 64)
    assert out2.shape == (2, 2048, 64), out2.shape
    assert jnp.allclose(out2, ref2, rtol=1e-6, atol=1e-6), "mismatch vs reference (dim=64)"

    print("KERNEL_OK")
</pallas_src>

<mosaic_0001>
module attributes {stable_mosaic.version = 11 : i64} {
  func.func @_sinusoidal_kernel(%arg0: i32, %arg1: memref<8x4xf32, #tpu.memory_space<vmem>>, %arg2: memref<4x128xf32, #tpu.memory_space<vmem>>, %arg3: memref<8x128xf32, #tpu.memory_space<vmem>>) attributes {dimension_semantics = [#tpu.dimension_semantics<parallel>], iteration_bounds = array<i64: 1>, scalar_prefetch = 0 : i64, scratch_operands = 0 : i64, tpu.core_type = #tpu.core_type<tc>, window_params = [{transform_indices = @transform_0, window_bounds = array<i64: 8, 4>}, {pipeline_mode = #tpu.pipeline_mode<synchronous>, transform_indices = @transform_1, window_bounds = array<i64: 4, 128>}, {transform_indices = @transform_2, window_bounds = array<i64: 8, 128>}]} {
    %c0 = arith.constant 0 : index
    %c0_0 = arith.constant 0 : index
    %0 = vector.load %arg1[%c0, %c0_0] : memref<8x4xf32, #tpu.memory_space<vmem>>, vector<8x4xf32>
    %c0_1 = arith.constant 0 : index
    %c0_2 = arith.constant 0 : index
    %1 = vector.load %arg2[%c0_1, %c0_2] : memref<4x128xf32, #tpu.memory_space<vmem>>, vector<4x128xf32>
    %2 = vector.extract_strided_slice %0 {offsets = [0, 0], sizes = [8, 1], strides = [1, 1]} : vector<8x4xf32> to vector<8x1xf32>
    %3 = vector.extract_strided_slice %1 {offsets = [0, 0], sizes = [1, 128], strides = [1, 1]} : vector<4x128xf32> to vector<1x128xf32>
    %4 = vector.broadcast %2 : vector<8x1xf32> to vector<8x128xf32>
    %5 = vector.broadcast %3 : vector<1x128xf32> to vector<8x128xf32>
    %6 = arith.mulf %4, %5 : vector<8x128xf32>
    %7 = vector.extract_strided_slice %0 {offsets = [0, 1], sizes = [8, 1], strides = [1, 1]} : vector<8x4xf32> to vector<8x1xf32>
    %8 = vector.extract_strided_slice %1 {offsets = [1, 0], sizes = [1, 128], strides = [1, 1]} : vector<4x128xf32> to vector<1x128xf32>
    %9 = vector.broadcast %7 : vector<8x1xf32> to vector<8x128xf32>
    %10 = vector.broadcast %8 : vector<1x128xf32> to vector<8x128xf32>
    %11 = arith.mulf %9, %10 : vector<8x128xf32>
    %12 = arith.addf %6, %11 : vector<8x128xf32>
    %13 = vector.extract_strided_slice %0 {offsets = [0, 2], sizes = [8, 1], strides = [1, 1]} : vector<8x4xf32> to vector<8x1xf32>
    %14 = vector.extract_strided_slice %1 {offsets = [2, 0], sizes = [1, 128], strides = [1, 1]} : vector<4x128xf32> to vector<1x128xf32>
    %15 = vector.broadcast %13 : vector<8x1xf32> to vector<8x128xf32>
    %16 = vector.broadcast %14 : vector<1x128xf32> to vector<8x128xf32>
    %17 = arith.mulf %15, %16 : vector<8x128xf32>
    %18 = arith.addf %12, %17 : vector<8x128xf32>
    %19 = vector.extract_strided_slice %0 {offsets = [0, 3], sizes = [8, 1], strides = [1, 1]} : vector<8x4xf32> to vector<8x1xf32>
    %20 = vector.extract_strided_slice %1 {offsets = [3, 0], sizes = [1, 128], strides = [1, 1]} : vector<4x128xf32> to vector<1x128xf32>
    %21 = vector.broadcast %19 : vector<8x1xf32> to vector<8x128xf32>
    %22 = vector.broadcast %20 : vector<1x128xf32> to vector<8x128xf32>
    %23 = arith.mulf %21, %22 : vector<8x128xf32>
    %24 = arith.addf %18, %23 : vector<8x128xf32>
    %c0_3 = arith.constant 0 : index
    %c0_4 = arith.constant 0 : index
    %25 = vector.load %arg3[%c0_3, %c0_4] : memref<8x128xf32, #tpu.memory_space<vmem>>, vector<8x128xf32>
    tpu.vector_store %arg3[%c0_3, %c0_4], %24 {strides = array<i32>} : memref<8x128xf32, #tpu.memory_space<vmem>>, vector<8x128xf32>,
    return
  }
  func.func @transform_0(%arg0: i32) -> (i32, i32) {
    %c0_i32 = arith.constant 0 : i32
    %c0_i32_0 = arith.constant 0 : i32
    return %arg0, %c0_i32 : i32, i32
  }
  func.func @transform_1(%arg0: i32) -> (i32, i32) {
    %c0_i32 = arith.constant 0 : i32
    %c0_i32_0 = arith.constant 0 : i32
    %c0_i32_1 = arith.constant 0 : i32
    return %c0_i32, %c0_i32_0 : i32, i32
  }
  func.func @transform_2(%arg0: i32) -> (i32, i32) {
    %c0_i32 = arith.constant 0 : i32
    %c0_i32_0 = arith.constant 0 : i32
    return %arg0, %c0_i32 : i32, i32
  }
}

</mosaic_0001>

<llo_original>
// kernel: tpu_custom_call.1
$region0: #{tpu_custom_call.1}
  #allocation0 [shape = 'u32[]', space=smem, size = 0x4, offset = 0x4, fixed_abs, tag = 'smem constant byte address 0x4 - core index']
  #allocation1 [shape = 'u32[144,128]{1,0:T(1,128)}', space=vmem, size = 0x12000, scoped, tag = 'internal scratch']
  %s0 = inlined_call_operand.vmem [shape: f32[8,4], index: 0, kind: input, shape index: {}]
  %s1 = inlined_call_operand.vmem [shape: f32[4,128], index: 1, kind: input, shape index: {}]
  %s2 = inlined_call_operand.hbm [shape: f32[8,128], index: 2, kind: output, shape index: {}]
  %s3 = sld [smem:[#allocation0]]
  $region18: #{tpu_custom_call.1} parent=0
    _
  %s5 = ssub.s32 1, %s3
  %s6 = scalar_select 0, %s5, %s3
  $region1: #{tpu_custom_call.1} parent=0
    #allocation2 [shape = 'u8[4096]{0}', space=vmem, size = 0x1000, scoped, tag = 'output window, operand 0, single buffered']
    #allocation3 [shape = 's32[1]{0}', space=sflag, size = 0x4, scoped, tag = 'scoped memory for tpu_custom_call.1']
    %7 = vsyncpa [#allocation3], 0
    // Predicated region
    $region2: #{tpu_custom_call.1} parent=1 // pred_check
      _
    $region3: #{tpu_custom_call.1} parent=1 // pred_check_branch
      %9 = sbr.rel (0) target = $region5
    $region4: #{tpu_custom_call.1} parent=1 // pred_region
      _
    $region5: #{tpu_custom_call.1} parent=1 // pred_fallthru
      _
    // Predicated region
    $region6: #{tpu_custom_call.1} parent=1 // pred_check
      _
    $region7: #{tpu_custom_call.1} parent=1 // pred_check_branch
      %11 = sbr.rel (0) target = $region9
    $region8: #{tpu_custom_call.1} parent=1 // pred_region
      _
    $region9: #{tpu_custom_call.1} parent=1 // pred_fallthru
      _
    %v12 = vld [vmem:[%s0] sm:$0xff]
    %v13 = vld [vmem:[%s1] sm:$0xf]
    %15 = vset.pattern.permute.xlu0 0
    %16 = vperm.xlu0 %15, %v12
    %v17 = vpop.permute.xlu0 %16
    %v19 = vlaneseq
    %v20 = vshrl.u32 %v19, 7
    %v21 = vsub.s32 0, %v20
    %v22 = vrot.slane %v13, %v21
    %v23 = vmul.f32 %v17, %v22
    %24 = vset.pattern.permute.xlu0 1
    %25 = vperm.xlu0 %24, %v12
    %v26 = vpop.permute.xlu0 %25
    %v28 = vlaneseq
    %v29 = vshrl.u32 %v28, 7
    %v30 = vsub.s32 1, %v29
    %v31 = vrot.slane %v13, %v30
    %v32 = vmul.f32 %v26, %v31
    %v33 = vadd.f32 %v23, %v32
    %34 = vset.pattern.permute.xlu0 2
    %35 = vperm.xlu0 %34, %v12
    %v36 = vpop.permute.xlu0 %35
    %v38 = vlaneseq
    %v39 = vshrl.u32 %v38, 7
    %v40 = vsub.s32 2, %v39
    %v41 = vrot.slane %v13, %v40
    %v42 = vmul.f32 %v36, %v41
    %v43 = vadd.f32 %v33, %v42
    %44 = vset.pattern.permute.xlu0 3
    %45 = vperm.xlu0 %44, %v12
    %v46 = vpop.permute.xlu0 %45
    %v48 = vlaneseq
    %v49 = vshrl.u32 %v48, 7
    %v50 = vsub.s32 3, %v49
    %v51 = vrot.slane %v13, %v50
    %v52 = vmul.f32 %v46, %v51
    %v53 = vadd.f32 %v43, %v52
    %54 = vst [vmem:[#allocation2] sm:$0xff] %v53
    // Predicated region
    $region10: #{tpu_custom_call.1} parent=1 // pred_check
      _
    $region11: #{tpu_custom_call.1} parent=1 // pred_check_branch
      %56 = sbr.rel (0) target = $region13
    $region12: #{tpu_custom_call.1} parent=1 // pred_region
      %s58 = ssub.s32 128, 128
      %59 = vsyncadd [#allocation3], %s58
      %s61 = sshll.u32 [#allocation2], 4
      %s62 = int_to_ptr.vmem [resolvable:$true] %s61
      %64 = dma.vmem_to_hbm [thread:$0]  %s62, 128, %s2, [#allocation3]
    $region13: #{tpu_custom_call.1} parent=1 // pred_fallthru
      _
    // Predicated region
    $region14: #{tpu_custom_call.1} parent=1 // pred_check
      _
    $region15: #{tpu_custom_call.1} parent=1 // pred_check_branch
      %66 = sbr.rel (0) target = $region17
    $region16: #{tpu_custom_call.1} parent=1 // pred_region
      %67 = dma.done [#allocation3], 128
    $region17: #{tpu_custom_call.1} parent=1 // pred_fallthru
      _
    %68 = vsyncpa [#allocation3], 1

</llo_original>
